<compile_context>
chip_gen: v5e
topology: v5e:2x2
jax: 0.10.0
libtpu: 0.0.40
codegen_flags: <defaults>
</compile_context>

<pallas_src>
import jax
import jax.numpy as jnp
from jax.experimental import pallas as pl
from jax.experimental.pallas import tpu as pltpu

_LANES = 128                    # vreg lane width; lane-dense last dim
_ROW_BLOCK = 2048               # 2048x128 f32 = 1 MiB per block (tiled path)
_MAX_SINGLE_BLOCK_ROWS = 8192   # 8192x128 f32 = 4 MiB slab -> no-grid path
_MAX_SINGLE_BLOCK_BYTES = _MAX_SINGLE_BLOCK_ROWS * _LANES * 4
_FUSION_BYTES = 64 * 1024       # below this, prefer_fusion=True skips Pallas


def _constraint_kernel(p_ref, o_ref):
    # constraint(params) = 0.5 * (tanh(params) + 1)
    # tanh -> EUP slot; the *0.5 and +1 ride free in VALU slots.
    x = p_ref[...].astype(jnp.float32)
    o_ref[...] = (0.5 * (jnp.tanh(x) + 1.0)).astype(o_ref.dtype)


def _round_up(x: int, m: int) -> int:
    return pl.cdiv(x, m) * m


def _tiled_call(slab: jax.Array, rows: int, row_block: int) -> jax.Array:
    """Row-tiled elementwise launch over a lane-dense (rows, 128) slab."""
    # Never ask for a block taller than the (8-rounded) slab.
    row_block = min(row_block, _round_up(rows, 8))
    steps = pl.cdiv(rows, row_block)
    # v7x megacore: avoid a short odd grid (e.g. 3 steps -> 2/1 imbalance
    # across the 2 TensorCores).  Harmless no-op on v5e/v6e.
    if 1 < steps < 8 and steps % 2 == 1 and row_block >= 16:
        row_block //= 2
        steps = pl.cdiv(rows, row_block)
    return pl.pallas_call(
        _constraint_kernel,
        out_shape=jax.ShapeDtypeStruct((rows, _LANES), slab.dtype),
        grid=(steps,),
        in_specs=[pl.BlockSpec((row_block, _LANES), lambda i: (i, 0))],
        out_specs=pl.BlockSpec((row_block, _LANES), lambda i: (i, 0)),
        compiler_params=pltpu.CompilerParams(
            dimension_semantics=("parallel",)),
    )(slab)


def square_patch_forward(
    params: jax.Array,
    *,
    max_single_block_rows: int = _MAX_SINGLE_BLOCK_ROWS,
    row_block: int = _ROW_BLOCK,
    prefer_fusion: bool = False,
) -> jax.Array:
    """Applies the SquarePatch constraint 0.5*(tanh(x)+1).

    params: float32 array of shape (3, patch_size, patch_size).
    """
    orig_shape = params.shape
    n = params.size
    nbytes = n * params.dtype.itemsize

    if prefer_fusion and nbytes <= _FUSION_BYTES:
        # Tiny default patch: a standalone Mosaic launch is pure overhead and
        # blocks XLA fusion with the consumer — emit plain jnp instead.
        return 0.5 * (jnp.tanh(params) + 1.0)

    if n % _LANES == 0:
        # Lane-dense slab via a free bitcast reshape: no pad, no slice.
        rows = n // _LANES
        slab = params.reshape(rows, _LANES)
        if rows <= max_single_block_rows:
            # Single full-array VMEM block, no grid: no pipeline
            # prologue/epilogue for a launch-bound op.
            out = pl.pallas_call(
                _constraint_kernel,
                out_shape=jax.ShapeDtypeStruct((rows, _LANES), params.dtype),
            )(slab)
        else:
            out = _tiled_call(slab, rows, row_block)
        return out.reshape(orig_shape)

    # Element count not a multiple of 128 (patch_size not a multiple of 16).
    if nbytes <= _MAX_SINGLE_BLOCK_BYTES:
        # Run on the native (3, P, P) shape as one full-array block — avoids
        # the pad/slice HBM round trips; masked partial-lane stores are
        # irrelevant at this size.
        return pl.pallas_call(
            _constraint_kernel,
            out_shape=jax.ShapeDtypeStruct(orig_shape, params.dtype),
        )(params)

    # Rare: large AND non-128-aligned.  Pad only to a 128-lane multiple and
    # let the cdiv grid mask the trailing partial block; slice only because a
    # pad was actually applied.
    rows = pl.cdiv(n, _LANES)
    flat = jnp.pad(params.reshape(-1), (0, rows * _LANES - n))
    out = _tiled_call(flat.reshape(rows, _LANES), rows, row_block)
    return out.reshape(-1)[:n].reshape(orig_shape)


def init_square_patch_params(key, patch_size: int, typ: str = "random"):
    """Deterministic parameter init mirroring SquarePatch.__init__."""
    if typ == "grey":
        return jnp.zeros((3, patch_size, patch_size), dtype=jnp.float32)
    elif typ == "random":
        u = jax.random.uniform(key, (3, patch_size, patch_size), dtype=jnp.float32)
        return (u * 2.0 - 1.0) * 2.0
    else:
        raise ValueError(typ)


if __name__ == "__main__":
    key = jax.random.PRNGKey(0)

    # 1) Default small patch (P=16, 'random'): 768 elems -> (6,128) lane-dense
    #    slab, single full-array block, no grid, no pad, no slice.
    P = 16
    params = init_square_patch_params(key, P, typ="random")
    out = jax.block_until_ready(square_patch_forward(params))
    ref = 0.5 * (jnp.tanh(params) + 1.0)
    assert out.shape == (3, P, P)
    assert out.dtype == jnp.float32
    assert jnp.max(jnp.abs(out - ref)) < 1e-6

    # 2) 'grey' init (all zeros) -> constant 0.5 patch.
    params_grey = init_square_patch_params(key, P, typ="grey")
    out_grey = jax.block_until_ready(square_patch_forward(params_grey))
    assert jnp.max(jnp.abs(out_grey - 0.5)) < 1e-6

    # 3) Non-128-aligned element count (P=15 -> 675 elems): native-shape full
    #    block path, still no pad / slice copies.
    params_odd = init_square_patch_params(jax.random.PRNGKey(1), 15, typ="random")
    out_odd = jax.block_until_ready(square_patch_forward(params_odd))
    ref_odd = 0.5 * (jnp.tanh(params_odd) + 1.0)
    assert out_odd.shape == (3, 15, 15)
    assert jnp.max(jnp.abs(out_odd - ref_odd)) < 1e-6

    # 4) Tiled path (thresholds forced small so the test shapes stay small):
    #    P=80 -> 19200 elems = 150 rows; row_block=64 gives an odd 3-step grid
    #    which is auto-halved to 32 -> 5 steps with a masked partial trailing
    #    block (22 rows) — exercises the cdiv-grid writeback masking.
    params_big = init_square_patch_params(jax.random.PRNGKey(2), 80, typ="random")
    out_big = jax.block_until_ready(
        square_patch_forward(params_big, max_single_block_rows=16, row_block=64))
    ref_big = 0.5 * (jnp.tanh(params_big) + 1.0)
    assert out_big.shape == (3, 80, 80)
    assert jnp.max(jnp.abs(out_big - ref_big)) < 1e-6

    print("KERNEL_OK")
</pallas_src>

<mosaic_0001>
module attributes {stable_mosaic.version = 11 : i64} {
  func.func @_constraint_kernel(%arg0: memref<6x128xf32, #tpu.memory_space<vmem>>, %arg1: memref<6x128xf32, #tpu.memory_space<vmem>>) attributes {dimension_semantics = [], scalar_prefetch = 0 : i64, scratch_operands = 0 : i64, tpu.core_type = #tpu.core_type<tc>} {
    %c0 = arith.constant 0 : index
    %c0_0 = arith.constant 0 : index
    %0 = vector.load %arg0[%c0, %c0_0] : memref<6x128xf32, #tpu.memory_space<vmem>>, vector<6x128xf32>
    %1 = math.tanh %0 : vector<6x128xf32>
    %cst = arith.constant 1.000000e+00 : f32
    %2 = vector.broadcast %cst : f32 to vector<6x128xf32>
    %3 = arith.addf %1, %2 : vector<6x128xf32>
    %cst_1 = arith.constant 5.000000e-01 : f32
    %4 = vector.broadcast %cst_1 : f32 to vector<6x128xf32>
    %5 = arith.mulf %4, %3 : vector<6x128xf32>
    %c0_2 = arith.constant 0 : index
    %c0_3 = arith.constant 0 : index
    %6 = vector.load %arg1[%c0_2, %c0_3] : memref<6x128xf32, #tpu.memory_space<vmem>>, vector<6x128xf32>
    tpu.vector_store %arg1[%c0_2, %c0_3], %5 {strides = array<i32>} : memref<6x128xf32, #tpu.memory_space<vmem>>, vector<6x128xf32>,
    return
  }
}

</mosaic_0001>

<llo_original>
// kernel: tpu_custom_call.1
$region0: #{tpu_custom_call.1}
  #allocation0 [shape = 'u32[]', space=smem, size = 0x4, offset = 0x4, fixed_abs, tag = 'smem constant byte address 0x4 - core index']
  #allocation1 [shape = 'u32[72,128]{1,0:T(1,128)}', space=vmem, size = 0x9000, scoped, tag = 'internal scratch']
  %s0 = inlined_call_operand.hbm [shape: f32[6,128], index: 0, kind: input, shape index: {}]
  %s1 = inlined_call_operand.hbm [shape: f32[6,128], index: 1, kind: output, shape index: {}]
  %s2 = sld [smem:[#allocation0]]
  $region18: #{tpu_custom_call.1} parent=0
    _
  %s4 = ssub.s32 1, %s2
  %s5 = scalar_select 0, %s4, %s2
  $region1: #{tpu_custom_call.1} parent=0
    #allocation2 [shape = 'u8[4096]{0}', space=vmem, size = 0x1000, scoped, tag = 'input window, operand 0, single buffered']
    #allocation3 [shape = 's32[1]{0}', space=sflag, size = 0x4, scoped, tag = 'scoped memory for tpu_custom_call.1']
    #allocation4 [shape = 's32[1]{0}', space=sflag, size = 0x4, scoped, tag = 'scoped memory for tpu_custom_call.1']
    #allocation5 [shape = 'u8[4096]{0}', space=vmem, size = 0x1000, scoped, tag = 'output window, operand 0, single buffered']
    %6 = vsyncpa [#allocation3], 0
    %7 = vsyncpa [#allocation4], 0
    // Predicated region
    $region2: #{tpu_custom_call.1} parent=1 // pred_check
      _
    $region3: #{tpu_custom_call.1} parent=1 // pred_check_branch
      %9 = sbr.rel (0) target = $region5
    $region4: #{tpu_custom_call.1} parent=1 // pred_region
      %11 = vsyncadd [#allocation3], 0
      %s13 = sshll.u32 %s0, 4
      %s14 = int_to_ptr.hbm [resolvable:$true] %s13
      %s15 = sshll.u32 [#allocation2], 4
      %s16 = int_to_ptr.vmem [resolvable:$true] %s15
      %18 = dma.hbm_to_vmem [thread:$0]  %s14, 128, %s16, [#allocation3]
    $region5: #{tpu_custom_call.1} parent=1 // pred_fallthru
      _
    // Predicated region
    $region6: #{tpu_custom_call.1} parent=1 // pred_check
      _
    $region7: #{tpu_custom_call.1} parent=1 // pred_check_branch
      %20 = sbr.rel (0) target = $region9
    $region8: #{tpu_custom_call.1} parent=1 // pred_region
      %22 = dma.done [#allocation3], 128
    $region9: #{tpu_custom_call.1} parent=1 // pred_fallthru
      _
    %v23 = vld [vmem:[#allocation2] sm:$0x3f]
    %v24 = vtanh.pop %v23
    %v25 = vadd.f32 %v24, 1.0
    %v26 = vmul.f32 %v25, 0.5
    %27 = vst [vmem:[#allocation5] sm:$0x3f] %v26
    // Predicated region
    $region10: #{tpu_custom_call.1} parent=1 // pred_check
      _
    $region11: #{tpu_custom_call.1} parent=1 // pred_check_branch
      %29 = sbr.rel (0) target = $region13
    $region12: #{tpu_custom_call.1} parent=1 // pred_region
      %31 = vsyncadd [#allocation4], 0
      %s33 = sshll.u32 [#allocation5], 4
      %s34 = int_to_ptr.vmem [resolvable:$true] %s33
      %s35 = sshll.u32 %s1, 4
      %s36 = int_to_ptr.hbm [resolvable:$true] %s35
      %38 = dma.vmem_to_hbm [thread:$0]  %s34, 128, %s36, [#allocation4]
    $region13: #{tpu_custom_call.1} parent=1 // pred_fallthru
      _
    // Predicated region
    $region14: #{tpu_custom_call.1} parent=1 // pred_check
      _
    $region15: #{tpu_custom_call.1} parent=1 // pred_check_branch
      %40 = sbr.rel (0) target = $region17
    $region16: #{tpu_custom_call.1} parent=1 // pred_region
      %42 = dma.done [#allocation4], 128
    $region17: #{tpu_custom_call.1} parent=1 // pred_fallthru
      _
    %43 = vsyncpa [#allocation3], 1
    %44 = vsyncpa [#allocation4], 1

</llo_original>
